<compile_context>
chip_gen: v6e
topology: v6e:2x2x1
jax: 0.10.0
libtpu: 0.0.40
codegen_flags: <defaults>
</compile_context>

<pallas_src>
import functools

import jax
import jax.numpy as jnp
from jax.experimental import pallas as pl
from jax.experimental.pallas import tpu as pltpu


def _round_up(x, m):
    return ((x + m - 1) // m) * m


def _apply_activation(h, activation, *, in_kernel=False):
    """f32 elementwise activation (used both in-kernel and in the reference)."""
    if activation == "relu":
        return jnp.maximum(h, 0.0)
    if activation == "gelu":
        # tanh approximation (EUP-friendly).
        # TODO(synk): PyTorch nn.GELU default is exact erf; deviation ~1e-3.
        c = 0.7978845608028654  # sqrt(2/pi)
        return 0.5 * h * (1.0 + jnp.tanh(c * (h + 0.044715 * h * h * h)))
    if activation in ("silu", "swish"):
        denom = 1.0 + jnp.exp(-h)
        if in_kernel:
            return h * pl.reciprocal(denom, approx=True)   # EUP, not VALU div
        return h / denom
    if activation == "tanh":
        return jnp.tanh(h)
    if activation in ("identity", "none"):
        return h
    raise ValueError(f"unsupported activation: {activation}")


# ---------------------------------------------------------------------------
# Fused FFN kernel, hidden-dim streamed:
#   chunk 0      : LayerNorm -> cache x_norm (bf16), zero accumulator
#   every chunk j: acc += act(x_norm @ w1_j + b1_j) @ w2_j
#   last chunk   : out = acc + b2
# ---------------------------------------------------------------------------

def _ffn_kernel(x_ref, g_ref, b_ref, w1_ref, b1_ref, w2_ref, b2_ref, o_ref,
                acc_ref, xn_ref, *, eps, do_ln, activation):
    j = pl.program_id(1)

    @pl.when(j == 0)
    def _init():
        acc_ref[...] = jnp.zeros_like(acc_ref)
        x = x_ref[...].astype(jnp.float32)     # in-kernel upcast (free on VPU)
        if do_ln:
            mean = jnp.mean(x, axis=-1, keepdims=True)
            var = jnp.mean(jnp.square(x - mean), axis=-1, keepdims=True)
            x = (x - mean) * jax.lax.rsqrt(var + eps)
            x = x * g_ref[...] + b_ref[...]
        xn_ref[...] = x.astype(jnp.bfloat16)    # cached normalized activations

    # linear1 chunk + bias + activation: bf16 MXU operands, f32 acc/epilogue.
    h = jnp.dot(xn_ref[...], w1_ref[...],
                preferred_element_type=jnp.float32) + b1_ref[...]
    h = _apply_activation(h, activation, in_kernel=True)

    # linear2 chunk, accumulated in f32.
    acc_ref[...] += jnp.dot(h.astype(jnp.bfloat16), w2_ref[...],
                            preferred_element_type=jnp.float32)

    @pl.when(j == pl.num_programs(1) - 1)
    def _finalize():
        o_ref[...] = (acc_ref[...] + b2_ref[...]).astype(o_ref.dtype)


# ---------------------------------------------------------------------------
# Parameters (PyTorch nn.Linear / nn.LayerNorm init semantics)
# ---------------------------------------------------------------------------

def init_ffn_params(key, in_dim, hidden_dim, out_dim, do_ln=True):
    k1, k2, k3, k4 = jax.random.split(key, 4)
    bound1 = 1.0 / (in_dim ** 0.5)
    bound2 = 1.0 / (hidden_dim ** 0.5)
    params = {
        "w1": jax.random.uniform(k1, (in_dim, hidden_dim), jnp.float32,
                                 -bound1, bound1),
        "b1": jax.random.uniform(k2, (hidden_dim,), jnp.float32,
                                 -bound1, bound1),
        "w2": jax.random.uniform(k3, (hidden_dim, out_dim), jnp.float32,
                                 -bound2, bound2),
        "b2": jax.random.uniform(k4, (out_dim,), jnp.float32,
                                 -bound2, bound2),
    }
    if do_ln:
        params["gamma"] = jnp.ones((in_dim,), jnp.float32)
        params["beta"] = jnp.zeros((in_dim,), jnp.float32)
    return params


def _prepare_params(params, in_dim, hidden_dim, out_dim, hid_p, do_ln):
    """Pad only the hidden dim (to the chunk multiple), cast weights to bf16.

    Padded w1 columns / w2 rows are zero, so padded hidden lanes contribute
    exactly zero to the output (regardless of act(0)); out_dim is NOT padded.
    Parameter-sized one-time work; hoist/jit-cache in a real model.
    """
    w1 = jnp.pad(params["w1"],
                 ((0, 0), (0, hid_p - hidden_dim))).astype(jnp.bfloat16)
    b1 = jnp.pad(params["b1"],
                 (0, hid_p - hidden_dim)).astype(jnp.float32).reshape(1, hid_p)
    w2 = jnp.pad(params["w2"],
                 ((0, hid_p - hidden_dim), (0, 0))).astype(jnp.bfloat16)
    b2 = params["b2"].astype(jnp.float32).reshape(1, out_dim)
    if do_ln:
        gamma = params["gamma"].astype(jnp.float32).reshape(1, in_dim)
        beta = params["beta"].astype(jnp.float32).reshape(1, in_dim)
    else:
        gamma = jnp.ones((1, in_dim), jnp.float32)
        beta = jnp.zeros((1, in_dim), jnp.float32)
    return w1, b1, w2, b2, gamma, beta


# ---------------------------------------------------------------------------
# Generation-aware sizing
# ---------------------------------------------------------------------------

def _vmem_capacity_bytes():
    try:
        return int(pltpu.get_tpu_info().vmem_capacity_bytes)
    except Exception:
        return 64 * 1024 * 1024   # conservative: v7x per-TC VMEM


def _select_tiles(M, in_dim, hidden_dim, out_dim, x_itemsize, out_itemsize):
    vmem_cap = _vmem_capacity_bytes()
    if vmem_cap >= 128 * 1024 * 1024:        # v5e / v6e
        vmem_limit = 100 * 1024 * 1024
        tm_cap = 1024
    else:                                    # v7x (64 MiB per TC)
        vmem_limit = 48 * 1024 * 1024
        tm_cap = 512

    # Hidden chunk width: multiple of 256 (v6e/v7x 2x256 MXU; also a multiple
    # of 128 so v5e's 4x128 MXU is equally happy).
    if hidden_dim <= 512:
        tk = _round_up(hidden_dim, 128)      # single chunk
    else:
        tk = 512
    hid_p = _round_up(hidden_dim, tk)
    n_chunks = hid_p // tk

    # Row-tile budget (double-buffered pipelined operands + single scratch).
    fixed = 2 * (in_dim * tk * 2 + tk * out_dim * 2          # w1_j, w2_j (bf16)
                 + tk * 4 + out_dim * 4 + 2 * in_dim * 4)    # b1_j, b2, ln
    per_row = 2 * (in_dim * x_itemsize + out_dim * out_itemsize)  # x, out
    per_row += out_dim * 4 + in_dim * 2 + tk * 4             # acc, xn, h live
    budget = int(vmem_limit * 0.7)
    tm_fit = max(8, ((budget - fixed) // max(per_row, 1)) // 8 * 8)
    # TODO(synk): if in_dim is so large that even tm=8 overflows, shrink tk.

    # Keep grid_m >= 2 so the M axis can shard across v7x's two TensorCores
    # (harmless extra ~0.35us step on 1-TC parts).
    tm = min(tm_cap, tm_fit, _round_up(pl.cdiv(M, 2), 8), _round_up(M, 8))
    tm = max(tm, 8)
    return tm, tk, hid_p, n_chunks, vmem_limit


# ---------------------------------------------------------------------------
# Public wrapper
# ---------------------------------------------------------------------------

def feedforward(x, params, *, do_ln=True, activation="relu", eps=1e-5):
    """x: (..., in_dim) -> (..., out_dim). Matches FeedForward.forward."""
    orig_shape = x.shape
    in_dim = orig_shape[-1]
    hidden_dim = params["w1"].shape[1]
    out_dim = params["w2"].shape[1]

    x2d = x.reshape(-1, in_dim)              # native dtype; upcast in-kernel
    M = x2d.shape[0]
    out_dtype = x.dtype

    tm, tk, hid_p, n_chunks, vmem_limit = _select_tiles(
        M, in_dim, hidden_dim, out_dim,
        jnp.dtype(x.dtype).itemsize, jnp.dtype(out_dtype).itemsize)
    grid_m = pl.cdiv(M, tm)

    w1, b1, w2, b2, gamma, beta = _prepare_params(
        params, in_dim, hidden_dim, out_dim, hid_p, do_ln)

    flops = 2 * M * (in_dim * hid_p + hid_p * out_dim)
    transcendentals = M * hid_p if activation in ("gelu", "silu", "swish",
                                                  "tanh") else 0
    bytes_accessed = (M * in_dim * jnp.dtype(x.dtype).itemsize
                      + M * out_dim * jnp.dtype(out_dtype).itemsize
                      + grid_m * (in_dim * hid_p + hid_p * out_dim) * 2
                      + (hid_p + out_dim + 2 * in_dim) * 4)

    out = pl.pallas_call(
        functools.partial(_ffn_kernel, eps=eps, do_ln=do_ln,
                          activation=activation),
        out_shape=jax.ShapeDtypeStruct((M, out_dim), out_dtype),
        grid=(grid_m, n_chunks),
        in_specs=[
            pl.BlockSpec((tm, in_dim), lambda i, j: (i, 0)),     # x tile
            pl.BlockSpec((1, in_dim), lambda i, j: (0, 0)),      # gamma
            pl.BlockSpec((1, in_dim), lambda i, j: (0, 0)),      # beta
            pl.BlockSpec((in_dim, tk), lambda i, j: (0, j)),     # w1 chunk
            pl.BlockSpec((1, tk), lambda i, j: (0, j)),          # b1 chunk
            pl.BlockSpec((tk, out_dim), lambda i, j: (j, 0)),    # w2 chunk
            pl.BlockSpec((1, out_dim), lambda i, j: (0, 0)),     # b2
        ],
        out_specs=pl.BlockSpec((tm, out_dim), lambda i, j: (i, 0)),
        scratch_shapes=[
            pltpu.VMEM((tm, out_dim), jnp.float32),    # output accumulator
            pltpu.VMEM((tm, in_dim), jnp.bfloat16),    # cached LayerNorm(x)
        ],
        compiler_params=pltpu.CompilerParams(
            dimension_semantics=("parallel", "arbitrary"),
            vmem_limit_bytes=vmem_limit,
        ),
        cost_estimate=pl.CostEstimate(flops=flops,
                                      transcendentals=transcendentals,
                                      bytes_accessed=bytes_accessed),
    )(x2d, gamma, beta, w1, b1, w2, b2)

    return out.reshape(orig_shape[:-1] + (out_dim,))


# ---------------------------------------------------------------------------
# Pure-JAX f32 reference (for correctness check)
# ---------------------------------------------------------------------------

def feedforward_reference(x, params, *, do_ln=True, activation="relu",
                          eps=1e-5):
    h = x.astype(jnp.float32)
    if do_ln:
        mean = jnp.mean(h, axis=-1, keepdims=True)
        var = jnp.mean(jnp.square(h - mean), axis=-1, keepdims=True)
        h = (h - mean) * jax.lax.rsqrt(var + eps) * params["gamma"] \
            + params["beta"]
    h = h @ params["w1"] + params["b1"]
    h = _apply_activation(h, activation)
    h = h @ params["w2"] + params["b2"]
    return h


# ---------------------------------------------------------------------------

if __name__ == "__main__":
    key = jax.random.PRNGKey(0)
    k_x, k_p = jax.random.split(key)

    batch, seq = 2, 8
    in_dim, hidden_dim, out_dim = 32, 64, 32
    do_ln = True

    params = init_ffn_params(k_p, in_dim, hidden_dim, out_dim, do_ln=do_ln)
    x = jax.random.normal(k_x, (batch, seq, in_dim), jnp.float32)

    # Main run (relu) — matches the module defaults used in the spec example.
    out = feedforward(x, params, do_ln=do_ln, activation="relu")
    out = jax.block_until_ready(out)
    assert out.shape == (batch, seq, out_dim), out.shape
    assert bool(jnp.all(jnp.isfinite(out)))

    # Loose tolerance: kernel uses bf16 MXU operands with f32 accumulation.
    ref = feedforward_reference(x, params, do_ln=do_ln, activation="relu")
    max_err = float(jnp.max(jnp.abs(out - ref)))
    assert max_err < 5e-2, f"max abs error {max_err}"

    # Exercise the EUP-reciprocal silu path as well.
    out_s = jax.block_until_ready(
        feedforward(x, params, do_ln=do_ln, activation="silu"))
    ref_s = feedforward_reference(x, params, do_ln=do_ln, activation="silu")
    max_err_s = float(jnp.max(jnp.abs(out_s - ref_s)))
    assert max_err_s < 5e-2, f"silu max abs error {max_err_s}"

    print("KERNEL_OK")
</pallas_src>

<mosaic_0001>
module attributes {stable_mosaic.version = 11 : i64} {
  func.func @_ffn_kernel(%arg0: i32, %arg1: i32, %arg2: memref<8x32xf32, #tpu.memory_space<vmem>>, %arg3: memref<1x32xf32, #tpu.memory_space<vmem>>, %arg4: memref<1x32xf32, #tpu.memory_space<vmem>>, %arg5: memref<32x128xbf16, #tpu.memory_space<vmem>>, %arg6: memref<1x128xf32, #tpu.memory_space<vmem>>, %arg7: memref<128x32xbf16, #tpu.memory_space<vmem>>, %arg8: memref<1x32xf32, #tpu.memory_space<vmem>>, %arg9: memref<8x32xf32, #tpu.memory_space<vmem>>, %arg10: memref<8x32xf32, #tpu.memory_space<vmem>>, %arg11: memref<8x32xbf16, #tpu.memory_space<vmem>>) attributes {dimension_semantics = [#tpu.dimension_semantics<parallel>, #tpu.dimension_semantics<arbitrary>], iteration_bounds = array<i64: 2, 1>, scalar_prefetch = 0 : i64, scratch_operands = 2 : i64, tpu.core_type = #tpu.core_type<tc>, window_params = [{transform_indices = @transform_0, window_bounds = array<i64: 8, 32>}, {pipeline_mode = #tpu.pipeline_mode<synchronous>, transform_indices = @transform_1, window_bounds = array<i64: 1, 32>}, {pipeline_mode = #tpu.pipeline_mode<synchronous>, transform_indices = @transform_2, window_bounds = array<i64: 1, 32>}, {transform_indices = @transform_3, window_bounds = array<i64: 32, 128>}, {transform_indices = @transform_4, window_bounds = array<i64: 1, 128>}, {transform_indices = @transform_5, window_bounds = array<i64: 128, 32>}, {pipeline_mode = #tpu.pipeline_mode<synchronous>, transform_indices = @transform_6, window_bounds = array<i64: 1, 32>}, {transform_indices = @transform_7, window_bounds = array<i64: 8, 32>}]} {
    %c0_i32 = arith.constant 0 : i32
    %0 = arith.cmpi eq, %arg1, %c0_i32 : i32
    %1 = arith.extui %0 : i1 to i32
    %c0_i32_0 = arith.constant 0 : i32
    %2 = arith.cmpi ne, %1, %c0_i32_0 : i32
    scf.if %2 {
      %cst_16 = arith.constant 0.000000e+00 : f32
      %20 = vector.broadcast %cst_16 : f32 to vector<8x32xf32>
      %c0_17 = arith.constant 0 : index
      %c0_18 = arith.constant 0 : index
      %21 = vector.load %arg10[%c0_17, %c0_18] : memref<8x32xf32, #tpu.memory_space<vmem>>, vector<8x32xf32>
      tpu.vector_store %arg10[%c0_17, %c0_18], %20 {strides = array<i32>} : memref<8x32xf32, #tpu.memory_space<vmem>>, vector<8x32xf32>,
      %c0_19 = arith.constant 0 : index
      %c0_20 = arith.constant 0 : index
      %22 = vector.load %arg2[%c0_19, %c0_20] : memref<8x32xf32, #tpu.memory_space<vmem>>, vector<8x32xf32>
      %cst_21 = arith.constant dense<0.000000e+00> : vector<8xf32>
      %23 = vector.multi_reduction <add>, %22, %cst_21 [1] : vector<8x32xf32> to vector<8xf32>
      %24 = vector.shape_cast %23 : vector<8xf32> to vector<8x1xf32>
      %cst_22 = arith.constant 3.200000e+01 : f32
      %25 = vector.broadcast %cst_22 : f32 to vector<8x1xf32>
      %26 = arith.divf %24, %25 : vector<8x1xf32>
      %27 = vector.broadcast %26 : vector<8x1xf32> to vector<8x32xf32>
      %28 = arith.subf %22, %27 : vector<8x32xf32>
      %29 = arith.mulf %28, %28 : vector<8x32xf32>
      %cst_23 = arith.constant dense<0.000000e+00> : vector<8xf32>
      %30 = vector.multi_reduction <add>, %29, %cst_23 [1] : vector<8x32xf32> to vector<8xf32>
      %31 = vector.shape_cast %30 : vector<8xf32> to vector<8x1xf32>
      %cst_24 = arith.constant 3.200000e+01 : f32
      %32 = vector.broadcast %cst_24 : f32 to vector<8x1xf32>
      %33 = arith.divf %31, %32 : vector<8x1xf32>
      %34 = vector.broadcast %26 : vector<8x1xf32> to vector<8x32xf32>
      %35 = arith.subf %22, %34 : vector<8x32xf32>
      %cst_25 = arith.constant 9.99999974E-6 : f32
      %36 = vector.broadcast %cst_25 : f32 to vector<8x1xf32>
      %37 = arith.addf %33, %36 : vector<8x1xf32>
      %38 = math.rsqrt %37 : vector<8x1xf32>
      %39 = vector.broadcast %38 : vector<8x1xf32> to vector<8x32xf32>
      %40 = arith.mulf %35, %39 : vector<8x32xf32>
      %c0_26 = arith.constant 0 : index
      %c0_27 = arith.constant 0 : index
      %41 = vector.load %arg3[%c0_26, %c0_27] : memref<1x32xf32, #tpu.memory_space<vmem>>, vector<1x32xf32>
      %42 = vector.broadcast %41 : vector<1x32xf32> to vector<8x32xf32>
      %43 = arith.mulf %40, %42 : vector<8x32xf32>
      %c0_28 = arith.constant 0 : index
      %c0_29 = arith.constant 0 : index
      %44 = vector.load %arg4[%c0_28, %c0_29] : memref<1x32xf32, #tpu.memory_space<vmem>>, vector<1x32xf32>
      %45 = vector.broadcast %44 : vector<1x32xf32> to vector<8x32xf32>
      %46 = arith.addf %43, %45 : vector<8x32xf32>
      %47 = arith.truncf %46 : vector<8x32xf32> to vector<8x32xbf16>
      %c0_30 = arith.constant 0 : index
      %c0_31 = arith.constant 0 : index
      %48 = vector.load %arg11[%c0_30, %c0_31] : memref<8x32xbf16, #tpu.memory_space<vmem>>, vector<8x32xbf16>
      tpu.vector_store %arg11[%c0_30, %c0_31], %47 {strides = array<i32>} : memref<8x32xbf16, #tpu.memory_space<vmem>>, vector<8x32xbf16>,
    } else {
    }
    %c0 = arith.constant 0 : index
    %c0_1 = arith.constant 0 : index
    %3 = vector.load %arg11[%c0, %c0_1] : memref<8x32xbf16, #tpu.memory_space<vmem>>, vector<8x32xbf16>
    %c0_2 = arith.constant 0 : index
    %c0_3 = arith.constant 0 : index
    %4 = vector.load %arg5[%c0_2, %c0_3] : memref<32x128xbf16, #tpu.memory_space<vmem>>, vector<32x128xbf16>
    %cst = arith.constant dense<0.000000e+00> : vector<8x128xf32>
    %5 = tpu.matmul %3, %4, %cst {dimension_numbers = #tpu.dot_dimension_numbers<[1], [0], [0], [1], [0, 0, 1, 1], [], []>} : vector<8x32xbf16>, vector<32x128xbf16>, vector<8x128xf32> -> vector<8x128xf32>
    %c0_4 = arith.constant 0 : index
    %c0_5 = arith.constant 0 : index
    %6 = vector.load %arg6[%c0_4, %c0_5] : memref<1x128xf32, #tpu.memory_space<vmem>>, vector<1x128xf32>
    %7 = vector.broadcast %6 : vector<1x128xf32> to vector<8x128xf32>
    %8 = arith.addf %5, %7 : vector<8x128xf32>
    %cst_6 = arith.constant 0.000000e+00 : f32
    %9 = vector.broadcast %cst_6 : f32 to vector<8x128xf32>
    %10 = arith.maximumf %8, %9 : vector<8x128xf32>
    %c0_7 = arith.constant 0 : index
    %c0_8 = arith.constant 0 : index
    %11 = vector.load %arg10[%c0_7, %c0_8] : memref<8x32xf32, #tpu.memory_space<vmem>>, vector<8x32xf32>
    %12 = arith.truncf %10 : vector<8x128xf32> to vector<8x128xbf16>
    %c0_9 = arith.constant 0 : index
    %c0_10 = arith.constant 0 : index
    %13 = vector.load %arg7[%c0_9, %c0_10] : memref<128x32xbf16, #tpu.memory_space<vmem>>, vector<128x32xbf16>
    %cst_11 = arith.constant dense<0.000000e+00> : vector<8x32xf32>
    %14 = tpu.matmul %12, %13, %cst_11 {dimension_numbers = #tpu.dot_dimension_numbers<[1], [0], [0], [1], [0, 0, 1, 1], [], []>} : vector<8x128xbf16>, vector<128x32xbf16>, vector<8x32xf32> -> vector<8x32xf32>
    %15 = arith.addf %11, %14 : vector<8x32xf32>
    %c0_12 = arith.constant 0 : index
    %c0_13 = arith.constant 0 : index
    %16 = vector.load %arg10[%c0_12, %c0_13] : memref<8x32xf32, #tpu.memory_space<vmem>>, vector<8x32xf32>
    tpu.vector_store %arg10[%c0_12, %c0_13], %15 {strides = array<i32>} : memref<8x32xf32, #tpu.memory_space<vmem>>, vector<8x32xf32>,
    %c0_i32_14 = arith.constant 0 : i32
    %17 = arith.cmpi eq, %arg1, %c0_i32_14 : i32
    %18 = arith.extui %17 : i1 to i32
    %c0_i32_15 = arith.constant 0 : i32
    %19 = arith.cmpi ne, %18, %c0_i32_15 : i32
    scf.if %19 {
      %c0_16 = arith.constant 0 : index
      %c0_17 = arith.constant 0 : index
      %20 = vector.load %arg10[%c0_16, %c0_17] : memref<8x32xf32, #tpu.memory_space<vmem>>, vector<8x32xf32>
      %c0_18 = arith.constant 0 : index
      %c0_19 = arith.constant 0 : index
      %21 = vector.load %arg8[%c0_18, %c0_19] : memref<1x32xf32, #tpu.memory_space<vmem>>, vector<1x32xf32>
      %22 = vector.broadcast %21 : vector<1x32xf32> to vector<8x32xf32>
      %23 = arith.addf %20, %22 : vector<8x32xf32>
      %c0_20 = arith.constant 0 : index
      %c0_21 = arith.constant 0 : index
      %24 = vector.load %arg9[%c0_20, %c0_21] : memref<8x32xf32, #tpu.memory_space<vmem>>, vector<8x32xf32>
      tpu.vector_store %arg9[%c0_20, %c0_21], %23 {strides = array<i32>} : memref<8x32xf32, #tpu.memory_space<vmem>>, vector<8x32xf32>,
    } else {
    }
    return
  }
  func.func @transform_0(%arg0: i32, %arg1: i32) -> (i32, i32) {
    %c0_i32 = arith.constant 0 : i32
    %c0_i32_0 = arith.constant 0 : i32
    return %arg0, %c0_i32 : i32, i32
  }
  func.func @transform_1(%arg0: i32, %arg1: i32) -> (i32, i32) {
    %c0_i32 = arith.constant 0 : i32
    %c0_i32_0 = arith.constant 0 : i32
    %c0_i32_1 = arith.constant 0 : i32
    return %c0_i32, %c0_i32_0 : i32, i32
  }
  func.func @transform_2(%arg0: i32, %arg1: i32) -> (i32, i32) {
    %c0_i32 = arith.constant 0 : i32
    %c0_i32_0 = arith.constant 0 : i32
    %c0_i32_1 = arith.constant 0 : i32
    return %c0_i32, %c0_i32_0 : i32, i32
  }
  func.func @transform_3(%arg0: i32, %arg1: i32) -> (i32, i32) {
    %c0_i32 = arith.constant 0 : i32
    %c0_i32_0 = arith.constant 0 : i32
    return %c0_i32, %arg1 : i32, i32
  }
  func.func @transform_4(%arg0: i32, %arg1: i32) -> (i32, i32) {
    %c0_i32 = arith.constant 0 : i32
    %c0_i32_0 = arith.constant 0 : i32
    return %c0_i32, %arg1 : i32, i32
  }
  func.func @transform_5(%arg0: i32, %arg1: i32) -> (i32, i32) {
    %c0_i32 = arith.constant 0 : i32
    %c0_i32_0 = arith.constant 0 : i32
    return %arg1, %c0_i32 : i32, i32
  }
  func.func @transform_6(%arg0: i32, %arg1: i32) -> (i32, i32) {
    %c0_i32 = arith.constant 0 : i32
    %c0_i32_0 = arith.constant 0 : i32
    %c0_i32_1 = arith.constant 0 : i32
    return %c0_i32, %c0_i32_0 : i32, i32
  }
  func.func @transform_7(%arg0: i32, %arg1: i32) -> (i32, i32) {
    %c0_i32 = arith.constant 0 : i32
    %c0_i32_0 = arith.constant 0 : i32
    return %arg0, %c0_i32 : i32, i32
  }
}

</mosaic_0001>

<llo_original>
// kernel: tpu_custom_call.1
$region0: #{tpu_custom_call.1}
  #allocation0 [shape = 'u32[]', space=smem, size = 0x4, offset = 0x4, fixed_abs, tag = 'smem constant byte address 0x4 - core index']
  #allocation1 [shape = 'u32[144,128]{1,0:T(1,128)}', space=vmem, size = 0x12000, scoped, tag = 'internal scratch']
  #allocation2 [shape = 'f32[8,32]{1,0:T(8,128)}', space=vmem, size = 0x1000, scoped, tag = 'scratch operand']
  #allocation3 [shape = 'bf16[8,32]{1,0:T(8,128)(2,1)}', space=vmem, size = 0x800, scoped, tag = 'scratch operand']
  %s0 = inlined_call_operand.vmem [shape: f32[16,32], index: 0, kind: input, shape index: {}]
  %s1 = inlined_call_operand.vmem [shape: f32[1,32], index: 1, kind: input, shape index: {}]
  %s2 = inlined_call_operand.vmem [shape: f32[1,32], index: 2, kind: input, shape index: {}]
  %s3 = inlined_call_operand.vmem [shape: bf16[32,128], index: 3, kind: input, shape index: {}]
  %s4 = inlined_call_operand.vmem [shape: f32[1,128], index: 4, kind: input, shape index: {}]
  %s5 = inlined_call_operand.vmem [shape: bf16[128,32], index: 5, kind: input, shape index: {}]
  %s6 = inlined_call_operand.vmem [shape: f32[1,32], index: 6, kind: input, shape index: {}]
  %s7 = inlined_call_operand.hbm [shape: f32[16,32], index: 7, kind: output, shape index: {}]
  %s8 = sld [smem:[#allocation0]]
  $region69: #{tpu_custom_call.1} parent=0
    _
  %s10 = ssub.s32 1, %s8
  %s11 = scalar_select 0, %s10, %s8
  $region1: #{tpu_custom_call.1} parent=0
    #allocation4 [shape = 'u8[8192]{0}', space=vmem, size = 0x2000, scoped, tag = 'output window, operand 0']
    #allocation5 [shape = 's32[2]{0}', space=sflag, size = 0x8, scoped, tag = 'scoped memory for tpu_custom_call.1']
    %12 = vsyncpa [#allocation5], 0
    %s13 = scalar_lea.sflag [#allocation5], 1
    %14 = vsyncpa %s13, 0
    loop: start=0, step=1, limit=4
    $region2: #{tpu_custom_call.1} parent=1 // loop_pre_header
      _
    $region3: #{tpu_custom_call.1} parent=1 // loop_header
      %s16 = sphi 0, %s20
      %p17 = scmp.ge.s32.totalorder %s16, 4
      %s23 = sphi 0, %s35
      %s24 = sphi 0, %s31
      %s25 = sphi 0, %s23
      %s26 = sphi 0, %s24
      %s27 = sphi 0, %s25
      %s28 = sphi 0, %s26
      %s38 = sphi 0, %s40
      %s41 = sphi 0, %s38
      %s42 = sphi 0, %s41
      %s58 = sphi 0, %s42
      %s62 = sphi 0, %s62
      %s64 = sphi 0, %s62
      %s65 = sphi 0, %s64
      %s79 = sphi 0, %s65
      %s83 = sphi 0, %s83
      %s85 = sphi 0, %s83
      %s86 = sphi 0, %s85
      %s100 = sphi 0, %s86
      %s106 = sphi 0, %s108
      %s109 = sphi 0, %s106
      %s110 = sphi 0, %s109
      %s126 = sphi 0, %s110
      %s132 = sphi 0, %s134
      %s135 = sphi 0, %s132
      %s136 = sphi 0, %s135
      %s152 = sphi 0, %s136
      %s158 = sphi 0, %s160
      %s161 = sphi 0, %s158
      %s162 = sphi 0, %s161
      %s178 = sphi 0, %s162
      %s182 = sphi 0, %s182
      %s184 = sphi 0, %s182
      %s185 = sphi 0, %s184
      %s199 = sphi 0, %s185
      %s205 = sphi 0, %s207
      %s208 = sphi 0, %s205
      %s209 = sphi 0, %s208
      %s225 = sphi 0, %s209
    $region4: #{tpu_custom_call.1} parent=1 // loop_header_branch
      %19 = sbr.rel (%p17) target = $region8
    $region5: #{tpu_custom_call.1} parent=1 // loop_body
      %s21 = ssub.s32 %s16, 1
      %s22 = ssub.s32 %s16, 2
      %s29 = sadd.s32 1, %s24
      %p30 = scmp.ge.s32.totalorder %s29, 1
      %s31 = scalar_select %p30, 0, %s29
      %s32 = sadd.s32 1, %s23
      %s33 = scalar_select %p30, %s32, %s23
      %p34 = scmp.ge.s32.totalorder %s33, 2
      %s35 = scalar_select %p34, 0, %s33
      %s36 = ssub.s32 %s23, %s35
      %p37 = scmp.eq.s32.totalorder %s36, 0
      %s39 = sadd.s32 %s38, 1
      %s40 = scalar_select %p37, %s38, %s39
      %p43 = pneg %p37
      %p44 = scmp.eq.s32.totalorder %s16, 1
      %p45 = por %p43, %p44
      %p46 = scmp.ne.s32.totalorder %s38, %s41
      %p47 = scmp.eq.s32.totalorder %s16, 0
      %p48 = por %p46, %p47
      %p49 = scmp.ne.s32.totalorder %s38, %s41
      %p50 = scmp.eq.s32.totalorder %s21, 1
      %p51 = por %p49, %p50
      %p52 = scmp.ne.s32.totalorder %s41, %s42
      %p53 = scmp.eq.s32.totalorder %s21, 0
      %p54 = por %p52, %p53
      %p55 = scmp.ne.s32.totalorder %s41, %s42
      %p56 = scmp.eq.s32.totalorder %s22, 1
      %p57 = por %p55, %p56
      %p59 = scmp.ne.s32.totalorder %s42, %s58
      %p60 = scmp.eq.s32.totalorder %s22, 0
      %p61 = por %p59, %p60
      %s63 = sadd.s32 %s62, 1
      %p66 = scmp.eq.s32.totalorder %s16, 1
      %p67 = scmp.ne.s32.totalorder %s62, %s64
      %p68 = scmp.eq.s32.totalorder %s16, 0
      %p69 = por %p67, %p68
      %p70 = scmp.ne.s32.totalorder %s62, %s64
      %p71 = scmp.eq.s32.totalorder %s21, 1
      %p72 = por %p70, %p71
      %p73 = scmp.ne.s32.totalorder %s64, %s65
      %p74 = scmp.eq.s32.totalorder %s21, 0
      %p75 = por %p73, %p74
      %p76 = scmp.ne.s32.totalorder %s64, %s65
      %p77 = scmp.eq.s32.totalorder %s22, 1
      %p78 = por %p76, %p77
      %p80 = scmp.ne.s32.totalorder %s65, %s79
      %p81 = scmp.eq.s32.totalorder %s22, 0
      %p82 = por %p80, %p81
      %s84 = sadd.s32 %s83, 1
      %p87 = scmp.eq.s32.totalorder %s16, 1
      %p88 = scmp.ne.s32.totalorder %s83, %s85
      %p89 = scmp.eq.s32.totalorder %s16, 0
      %p90 = por %p88, %p89
      %p91 = scmp.ne.s32.totalorder %s83, %s85
      %p92 = scmp.eq.s32.totalorder %s21, 1
      %p93 = por %p91, %p92
      %p94 = scmp.ne.s32.totalorder %s85, %s86
      %p95 = scmp.eq.s32.totalorder %s21, 0
      %p96 = por %p94, %p95
      %p97 = scmp.ne.s32.totalorder %s85, %s86
      %p98 = scmp.eq.s32.totalorder %s22, 1
      %p99 = por %p97, %p98
      %p101 = scmp.ne.s32.totalorder %s86, %s100
      %p102 = scmp.eq.s32.totalorder %s22, 0
      %p103 = por %p101, %p102
      %s104 = ssub.s32 %s24, %s31
      %p105 = scmp.eq.s32.totalorder %s104, 0
      %s107 = sadd.s32 %s106, 1
      %s108 = scalar_select %p105, %s106, %s107
      %p111 = pneg %p105
      %p112 = scmp.eq.s32.totalorder %s16, 1
      %p113 = por %p111, %p112
      %p114 = scmp.ne.s32.totalorder %s106, %s109
      %p115 = scmp.eq.s32.totalorder %s16, 0
      %p116 = por %p114, %p115
      %p117 = scmp.ne.s32.totalorder %s106, %s109
      %p118 = scmp.eq.s32.totalorder %s21, 1
      %p119 = por %p117, %p118
      %p120 = scmp.ne.s32.totalorder %s109, %s110
      %p121 = scmp.eq.s32.totalorder %s21, 0
      %p122 = por %p120, %p121
      %p123 = scmp.ne.s32.totalorder %s109, %s110
      %p124 = scmp.eq.s32.totalorder %s22, 1
      %p125 = por %p123, %p124
      %p127 = scmp.ne.s32.totalorder %s110, %s126
      %p128 = scmp.eq.s32.totalorder %s22, 0
      %p129 = por %p127, %p128
      %s130 = ssub.s32 %s24, %s31
      %p131 = scmp.eq.s32.totalorder %s130, 0
      %s133 = sadd.s32 %s132, 1
      %s134 = scalar_select %p131, %s132, %s133
      %p137 = pneg %p131
      %p138 = scmp.eq.s32.totalorder %s16, 1
      %p139 = por %p137, %p138
      %p140 = scmp.ne.s32.totalorder %s132, %s135
      %p141 = scmp.eq.s32.totalorder %s16, 0
      %p142 = por %p140, %p141
      %p143 = scmp.ne.s32.totalorder %s132, %s135
      %p144 = scmp.eq.s32.totalorder %s21, 1
      %p145 = por %p143, %p144
      %p146 = scmp.ne.s32.totalorder %s135, %s136
      %p147 = scmp.eq.s32.totalorder %s21, 0
      %p148 = por %p146, %p147
      %p149 = scmp.ne.s32.totalorder %s135, %s136
      %p150 = scmp.eq.s32.totalorder %s22, 1
      %p151 = por %p149, %p150
      %p153 = scmp.ne.s32.totalorder %s136, %s152
      %p154 = scmp.eq.s32.totalorder %s22, 0
      %p155 = por %p153, %p154
      %s156 = ssub.s32 %s24, %s31
      %p157 = scmp.eq.s32.totalorder %s156, 0
      %s159 = sadd.s32 %s158, 1
      %s160 = scalar_select %p157, %s158, %s159
      %p163 = pneg %p157
      %p164 = scmp.eq.s32.totalorder %s16, 1
      %p165 = por %p163, %p164
      %p166 = scmp.ne.s32.totalorder %s158, %s161
      %p167 = scmp.eq.s32.totalorder %s16, 0
      %p168 = por %p166, %p167
      %p169 = scmp.ne.s32.totalorder %s158, %s161
      %p170 = scmp.eq.s32.totalorder %s21, 1
      %p171 = por %p169, %p170
      %p172 = scmp.ne.s32.totalorder %s161, %s162
      %p173 = scmp.eq.s32.totalorder %s21, 0
      %p174 = por %p172, %p173
      %p175 = scmp.ne.s32.totalorder %s161, %s162
      %p176 = scmp.eq.s32.totalorder %s22, 1
      %p177 = por %p175, %p176
      %p179 = scmp.ne.s32.totalorder %s162, %s178
      %p180 = scmp.eq.s32.totalorder %s22, 0
      %p181 = por %p179, %p180
      %s183 = sadd.s32 %s182, 1
      %p186 = scmp.eq.s32.totalorder %s16, 1
      %p187 = scmp.ne.s32.totalorder %s182, %s184
      %p188 = scmp.eq.s32.totalorder %s16, 0
      %p189 = por %p187, %p188
      %p190 = scmp.ne.s32.totalorder %s182, %s184
      %p191 = scmp.eq.s32.totalorder %s21, 1
      %p192 = por %p190, %p191
      %p193 = scmp.ne.s32.totalorder %s184, %s185
      %p194 = scmp.eq.s32.totalorder %s21, 0
      %p195 = por %p193, %p194
      %p196 = scmp.ne.s32.totalorder %s184, %s185
      %p197 = scmp.eq.s32.totalorder %s22, 1
      %p198 = por %p196, %p197
      %p200 = scmp.ne.s32.totalorder %s185, %s199
      %p201 = scmp.eq.s32.totalorder %s22, 0
      %p202 = por %p200, %p201
      %s203 = ssub.s32 %s23, %s35
      %p204 = scmp.eq.s32.totalorder %s203, 0
      %s206 = sadd.s32 %s205, 1
      %s207 = scalar_select %p204, %s205, %s206
      %p210 = pneg %p204
      %p211 = scmp.eq.s32.totalorder %s16, 1
      %p212 = por %p210, %p211
      %p213 = scmp.ne.s32.totalorder %s205, %s208
      %p214 = scmp.eq.s32.totalorder %s16, 0
      %p215 = por %p213, %p214
      %p216 = scmp.ne.s32.totalorder %s205, %s208
      %p217 = scmp.eq.s32.totalorder %s21, 1
      %p218 = por %p216, %p217
      %p219 = scmp.ne.s32.totalorder %s208, %s209
      %p220 = scmp.eq.s32.totalorder %s21, 0
      %p221 = por %p219, %p220
      %p222 = scmp.ne.s32.totalorder %s208, %s209
      %p223 = scmp.eq.s32.totalorder %s22, 1
      %p224 = por %p222, %p223
      %p226 = scmp.ne.s32.totalorder %s209, %s225
      %p227 = scmp.eq.s32.totalorder %s22, 0
      %p228 = por %p226, %p227
      %p229 = scmp.le.s32.totalorder 1, %s16
      %p230 = scmp.lt.s32.totalorder %s16, 3
      %p231 = pnand %p229, %p230
      %p232 = pneg %p231
      // Predicated region
      $region9: #{tpu_custom_call.1} parent=5 // pred_check
        _
      $region10: #{tpu_custom_call.1} parent=5 // pred_check_branch
        %234 = sbr.rel (%p231) target = $region12
      $region11: #{tpu_custom_call.1} parent=5 // pred_region
        %s235 = ssub.s32 %s16, 1
        // Predicated region
        $region13: #{tpu_custom_call.1} parent=11 // pred_check
          %p236 = pneg %p75
        $region14: #{tpu_custom_call.1} parent=11 // pred_check_branch
          %238 = sbr.rel (%p236) target = $region16
        $region15: #{tpu_custom_call.1} parent=11 // pred_region
          _
        $region16: #{tpu_custom_call.1} parent=11 // pred_fallthru
          _
        // Predicated region
        $region17: #{tpu_custom_call.1} parent=11 // pred_check
          %p239 = pneg %p96
        $region18: #{tpu_custom_call.1} parent=11 // pred_check_branch
          %241 = sbr.rel (%p239) target = $region20
        $region19: #{tpu_custom_call.1} parent=11 // pred_region
          _
        $region20: #{tpu_custom_call.1} parent=11 // pred_fallthru
          _
        // Predicated region
        $region21: #{tpu_custom_call.1} parent=11 // pred_check
          %p242 = pneg %p122
        $region22: #{tpu_custom_call.1} parent=11 // pred_check_branch
          %244 = sbr.rel (%p242) target = $region24
        $region23: #{tpu_custom_call.1} parent=11 // pred_region
          %p245 = scmp.lt.s32.totalorder %s26, 0
          %s246 = scalar_select %p245, %s26, 0
          %s247 = smul.addr %s246, 4
          %s248 = scalar_lea.vmem %s3, %s247
        $region24: #{tpu_custom_call.1} parent=11 // pred_fallthru
          _
        // Predicated region
        $region25: #{tpu_custom_call.1} parent=11 // pred_check
          %p249 = pneg %p148
        $region26: #{tpu_custom_call.1} parent=11 // pred_check_branch
          %251 = sbr.rel (%p249) target = $region28
        $region27: #{tpu_custom_call.1} parent=11 // pred_region
          %p252 = scmp.lt.s32.totalorder %s26, 0
          %s253 = scalar_select %p252, %s26, 0
          %s254 = scalar_lea.vmem %s4, %s253
        $region28: #{tpu_custom_call.1} parent=11 // pred_fallthru
          _
        // Predicated region
        $region29: #{tpu_custom_call.1} parent=11 // pred_check
          %p255 = pneg %p174
        $region30: #{tpu_custom_call.1} parent=11 // pred_check_branch
          %257 = sbr.rel (%p255) target = $region32
        $region31: #{tpu_custom_call.1} parent=11 // pred_region
          %s258 = smul.u32 16, %s26
          %p259 = scmp.lt.s32.totalorder %s258, 15
          %s260 = scalar_select %p259, %s258, 15
          %s261 = smul.addr %s260, 4
          %s262 = scalar_lea.vmem %s5, %s261
          %s263 = smul.u32 16, %s26
        $region32: #{tpu_custom_call.1} parent=11 // pred_fallthru
          _
        // Predicated region
        $region33: #{tpu_custom_call.1} parent=11 // pred_check
          %p264 = pneg %p195
        $region34: #{tpu_custom_call.1} parent=11 // pred_check_branch
          %266 = sbr.rel (%p264) target = $region36
        $region35: #{tpu_custom_call.1} parent=11 // pred_region
          _
        $region36: #{tpu_custom_call.1} parent=11 // pred_fallthru
          _
      $region12: #{tpu_custom_call.1} parent=5 // pred_fallthru
        _
      %p267 = scmp.lt.s32.totalorder %s16, 2
      // Predicated region
      $region37: #{tpu_custom_call.1} parent=5 // pred_check
        %p268 = pneg %p267
      $region38: #{tpu_custom_call.1} parent=5 // pred_check_branch
        %270 = sbr.rel (%p268) target = $region40
      $region39: #{tpu_custom_call.1} parent=5 // pred_region
        // Predicated region
        $region41: #{tpu_custom_call.1} parent=39 // pred_check
          %p271 = pneg %p48
        $region42: #{tpu_custom_call.1} parent=39 // pred_check_branch
          %273 = sbr.rel (%p271) target = $region44
        $region43: #{tpu_custom_call.1} parent=39 // pred_region
          %p274 = scmp.lt.s32.totalorder %s23, 1
          %s275 = scalar_select %p274, %s23, 1
          %s276 = smul.addr %s275, 8
          %s277 = scalar_lea.vmem %s0, %s276
        $region44: #{tpu_custom_call.1} parent=39 // pred_fallthru
          _
      $region40: #{tpu_custom_call.1} parent=5 // pred_fallthru
        _
      %p278 = scmp.le.s32.totalorder 1, %s16
      %p279 = scmp.lt.s32.totalorder %s16, 3
      %p280 = pnand %p278, %p279
      %p281 = pneg %p280
      // Predicated region
      $region45: #{tpu_custom_call.1} parent=5 // pred_check
        _
      $region46: #{tpu_custom_call.1} parent=5 // pred_check_branch
        %283 = sbr.rel (%p280) target = $region48
      $region47: #{tpu_custom_call.1} parent=5 // pred_region
        %s284 = ssub.s32 %s16, 1
        %p285 = scmp.lt.s32.totalorder %s25, 1
        %s286 = scalar_select %p285, %s25, 1
        %s287 = smul.addr %s286, 8
        %s288 = scalar_lea.vmem %s0, %s287
        %p289 = pneg %p54
        %p290 = pneg %p51
        %p291 = pneg %p75
        %p292 = pneg %p72
        %p293 = pneg %p96
        %p294 = pneg %p93
        %p295 = scmp.lt.s32.totalorder %s26, 0
        %s296 = scalar_select %p295, %s26, 0
        %s297 = smul.addr %s296, 4
        %s298 = scalar_lea.vmem %s3, %s297
        %p299 = pneg %p122
        %p300 = pneg %p119
        %p301 = scmp.lt.s32.totalorder %s26, 0
        %s302 = scalar_select %p301, %s26, 0
        %s303 = scalar_lea.vmem %s4, %s302
        %p304 = pneg %p148
        %p305 = pneg %p145
        %s306 = smul.u32 16, %s26
        %p307 = scmp.lt.s32.totalorder %s306, 15
        %s308 = scalar_select %p307, %s306, 15
        %s309 = smul.addr %s308, 4
        %s310 = scalar_lea.vmem %s5, %s309
        %p311 = pneg %p174
        %p312 = pneg %p171
        %p313 = pneg %p195
        %p314 = pneg %p192
        %p315 = pneg %p221
        %p316 = pneg %p218
        %s317 = sand.u32 %s208, 1
        %s318 = scalar_lea.sflag [#allocation5], %s317
        %s319 = sand.u32 %s208, 1
        %s320 = smul.addr %s319, 8
        %s321 = scalar_lea.vmem [#allocation4], %s320
        %p322 = scmp.lt.s32.totalorder %s25, 1
        %s323 = scalar_select %p322, %s25, 1
        %s324 = smul.addr %s323, 8
        %s325 = scalar_lea.vmem %s0, %s324
        %p326 = scmp.lt.s32.totalorder %s26, 0
        %s327 = scalar_select %p326, %s26, 0
        %s328 = smul.addr %s327, 4
        %s329 = scalar_lea.vmem %s3, %s328
        %p330 = scmp.lt.s32.totalorder %s26, 0
        %s331 = scalar_select %p330, %s26, 0
        %s332 = scalar_lea.vmem %s4, %s331
        %s333 = smul.u32 16, %s26
        %p334 = scmp.lt.s32.totalorder %s333, 15
        %s335 = scalar_select %p334, %s333, 15
        %s336 = smul.addr %s335, 4
        %s337 = scalar_lea.vmem %s5, %s336
        %s338 = smul.u32 16, %s26
        %p340 = scmp.eq.s32.totalorder %s26, 0
        // Predicated region
        $region49: #{tpu_custom_call.1} parent=47 // pred_check
          %p341 = pneg %p340
        $region50: #{tpu_custom_call.1} parent=47 // pred_check_branch
          %343 = sbr.rel (%p341) target = $region52
        $region51: #{tpu_custom_call.1} parent=47 // pred_region
          %vm344 = vcmask 261120
          %345 = vst.msk [vmem:[#allocation2] sm:$0xff] %vm344, 0.0
          %v346 = vld [vmem:[%s325] sm:$0xff]
          %v347 = vsel %vm344, %v346, 0.0
          %348 = vadd.xlane.f32.xlu0 %v347
          %v349 = vpop.xlane.xlu0 %348
          %v350 = vrcp.pop 32.0
          %v351 = vmul.f32 %v349, %v350
          %v352 = vsub.f32 %v346, %v351
          %v353 = vmul.f32 %v352, %v352
          %v354 = vsel %vm344, %v353, 0.0
          %355 = vadd.xlane.f32.xlu0 %v354
          %v356 = vpop.xlane.xlu0 %355
          %v357 = vmul.f32 %v356, %v350
          %v358 = vadd.f32 %v357, 1e-05
          %v359 = vrsqrt.pop %v358
          %v360 = vmul.f32 %v352, %v359
          %v361 = vld [vmem:[%s1] sm:$0x1]
          %v363 = vlaneseq
          %v364 = vshrl.u32 %v363, 7
          %v365 = vsub.s32 0, %v364
          %v366 = vrot.slane %v361, %v365
          %v368 = vmul.f32 %v360, %v366
          %v369 = vld [vmem:[%s2] sm:$0x1]
          %v371 = vlaneseq
          %v372 = vshrl.u32 %v371, 7
          %v373 = vsub.s32 0, %v372
          %v374 = vrot.slane %v369, %v373
          %v376 = vadd.f32 %v368, %v374
          %v377 = vpack.c.bf16 %v376, %v376
          %vm378 = vcmask 257024
          %379 = vst.msk [vmem:[#allocation3] sm:$0xf] %vm378, %v377
        $region52: #{tpu_custom_call.1} parent=47 // pred_fallthru
          _
        %v380 = vld [vmem:[#allocation3] sm:$0xf]
        %v381 = vld [vmem:[%s329] sm:$0xf]
        %v382 = vld [vmem:[%s329 + $0x4] sm:$0xf]
        %v383 = vld [vmem:[%s329 + $0x8] sm:$0xf]
        %v384 = vld [vmem:[%s329 + $0xc] sm:$0xf]
        %v385 = vld [vmem:[%s332] sm:$0x1]
        %v387 = vlaneseq
        %v388 = vshrl.u32 %v387, 7
        %v389 = vsub.s32 0, %v388
        %v390 = vrot.slane %v385, %v389
        %v396 = vunpack.c.l.b16 %v381
        %v397 = vunpack.c.l.b16 %v382
        %v398 = vunpack.c.l.b16 %v383
        %v399 = vunpack.c.l.b16 %v384
        %v400 = vpack.c.b16 %v397, %v396
        %v401 = vpack.c.b16 %v399, %v398
        %vm404 = vcmask 261120
        %v406 = vsel %vm404, %v380, 0
        %408 = vmatprep.subr.bf16.mxu0 0
        %409 = vmatpush1.bf16.msra.mxu0 0
        %410 = vmatprep.subr.bf16.mxu0 0
        %411 = vmatpush1.bf16.msra.mxu0 0
        %412 = vmatprep.subr.bf16.mxu0 0
        %413 = vmatpush1.bf16.msra.mxu0 0
        %414 = vmatprep.subr.bf16.mxu0 0
        %415 = vmatpush1.bf16.msra.mxu0 0
        %416 = vmatprep.subr.bf16.mxu0 0
        %417 = vmatpush1.bf16.msra.mxu0 0
        %418 = vmatprep.subr.bf16.mxu0 0
        %419 = vmatpush1.bf16.msra.mxu0 0
        %420 = vmatprep.subr.bf16.mxu0 0
        %421 = vmatpush1.bf16.msra.mxu0 %v401
        %422 = vmatprep.subr.bf16.mxu0 0
        %423 = vmatpush1.bf16.msra.mxu0 %v400
        %424 = vmatprep.subr.bf16.mxu0 0
        %425 = vmatpush2.bf16.msra.mxu0 0
        %426 = vmatprep.subr.bf16.mxu0 0
        %427 = vmatpush2.bf16.msra.mxu0 0
        %428 = vmatprep.subr.bf16.mxu0 0
        %429 = vmatpush2.bf16.msra.mxu0 0
        %430 = vmatprep.subr.bf16.mxu0 0
        %431 = vmatpush2.bf16.msra.mxu0 0
        %432 = vmatprep.subr.bf16.mxu0 0
        %433 = vmatpush2.bf16.msra.mxu0 0
        %434 = vmatprep.subr.bf16.mxu0 0
        %435 = vmatpush2.bf16.msra.mxu0 0
        %436 = vmatprep.subr.bf16.mxu0 0
        %437 = vmatpush2.bf16.msra.mxu0 0
        %438 = vmatprep.subr.bf16.mxu0 0
        %439 = vmatpush2.bf16.msra.mxu0 0
        %440 = vmatprep.mubr.bf16.mxu0 0
        %441 = vmatmul.mubr.bf16.gmra.mxu0 %v406
        %v442 = vpop.f32.mrf.mxu0
        %v443 = vadd.f32 %v390, %v442
        %v444 = vpop.f32.mrf.mxu0
        %v445 = vpop.f32.mrf.mxu0
        %v446 = vpop.f32.mrf.mxu0
        %447 = vdwg.mxu0
        %v448 = vmax.f32 %v443, 0.0
        %v449 = vld [vmem:[#allocation2] sm:$0xff]
        %v450 = vpack.c.bf16 %v448, %v448
        %v451 = vld [vmem:[%s337] sm:$0xf]
        %v452 = vld [vmem:[%s337 + $0x4] sm:$0xf]
        %v453 = vld [vmem:[%s337 + $0x8] sm:$0xf]
        %v454 = vld [vmem:[%s337 + $0xc] sm:$0xf]
        %v455 = vld [vmem:[%s337 + $0x10] sm:$0xf]
        %v456 = vld [vmem:[%s337 + $0x14] sm:$0xf]
        %v457 = vld [vmem:[%s337 + $0x18] sm:$0xf]
        %v458 = vld [vmem:[%s337 + $0x1c] sm:$0xf]
        %v459 = vld [vmem:[%s337 + $0x20] sm:$0xf]
        %v460 = vld [vmem:[%s337 + $0x24] sm:$0xf]
        %v461 = vld [vmem:[%s337 + $0x28] sm:$0xf]
        %v462 = vld [vmem:[%s337 + $0x2c] sm:$0xf]
        %v463 = vld [vmem:[%s337 + $0x30] sm:$0xf]
        %v464 = vld [vmem:[%s337 + $0x34] sm:$0xf]
        %v465 = vld [vmem:[%s337 + $0x38] sm:$0xf]
        %v466 = vld [vmem:[%s337 + $0x3c] sm:$0xf]
        %v483 = vunpack.c.l.b16 %v451
        %v484 = vunpack.c.l.b16 %v452
        %v485 = vunpack.c.l.b16 %v453
        %v486 = vunpack.c.l.b16 %v454
        %v487 = vunpack.c.l.b16 %v455
        %v488 = vunpack.c.l.b16 %v456
        %v489 = vunpack.c.l.b16 %v457
        %v490 = vunpack.c.l.b16 %v458
        %v491 = vunpack.c.l.b16 %v459
        %v492 = vunpack.c.l.b16 %v460
        %v493 = vunpack.c.l.b16 %v461
        %v494 = vunpack.c.l.b16 %v462
        %v495 = vunpack.c.l.b16 %v463
        %v496 = vunpack.c.l.b16 %v464
        %v497 = vunpack.c.l.b16 %v465
        %v498 = vunpack.c.l.b16 %v466
        %v499 = vpack.c.b16 %v484, %v483
        %v500 = vpack.c.b16 %v486, %v485
        %v501 = vpack.c.b16 %v488, %v487
        %v502 = vpack.c.b16 %v490, %v489
        %v503 = vpack.c.b16 %v492, %v491
        %v504 = vpack.c.b16 %v494, %v493
        %v505 = vpack.c.b16 %v496, %v495
        %v506 = vpack.c.b16 %v498, %v497
        %515 = vmatprep.subr.bf16.mxu0 0
        %516 = vmatpush1.bf16.msra.mxu0 %v506
        %517 = vmatprep.subr.bf16.mxu0 0
        %518 = vmatpush1.bf16.msra.mxu0 %v505
        %519 = vmatprep.subr.bf16.mxu0 0
        %520 = vmatpush1.bf16.msra.mxu0 %v504
        %521 = vmatprep.subr.bf16.mxu0 0
        %522 = vmatpush1.bf16.msra.mxu0 %v503
        %523 = vmatprep.subr.bf16.mxu0 0
        %524 = vmatpush1.bf16.msra.mxu0 %v502
        %525 = vmatprep.subr.bf16.mxu0 0
        %526 = vmatpush1.bf16.msra.mxu0 %v501
        %527 = vmatprep.subr.bf16.mxu0 0
        %528 = vmatpush1.bf16.msra.mxu0 %v500
        %529 = vmatprep.subr.bf16.mxu0 0
        %530 = vmatpush1.bf16.msra.mxu0 %v499
        %531 = vmatprep.subr.bf16.mxu0 0
        %532 = vmatpush2.bf16.msra.mxu0 0
        %533 = vmatprep.subr.bf16.mxu0 0
        %534 = vmatpush2.bf16.msra.mxu0 0
        %535 = vmatprep.subr.bf16.mxu0 0
        %536 = vmatpush2.bf16.msra.mxu0 0
        %537 = vmatprep.subr.bf16.mxu0 0
        %538 = vmatpush2.bf16.msra.mxu0 0
        %539 = vmatprep.subr.bf16.mxu0 0
        %540 = vmatpush2.bf16.msra.mxu0 0
        %541 = vmatprep.subr.bf16.mxu0 0
        %542 = vmatpush2.bf16.msra.mxu0 0
        %543 = vmatprep.subr.bf16.mxu0 0
        %544 = vmatpush2.bf16.msra.mxu0 0
        %545 = vmatprep.subr.bf16.mxu0 0
        %546 = vmatpush2.bf16.msra.mxu0 0
        %547 = vmatprep.mubr.bf16.mxu0 0
        %548 = vmatmul.mubr.bf16.gmra.mxu0 %v450
        %v549 = vpop.f32.mrf.mxu0
        %v550 = vadd.f32 0.0, %v549
        %v551 = vpop.f32.mrf.mxu0
        %v552 = vpop.f32.mrf.mxu0
        %v553 = vpop.f32.mrf.mxu0
        %554 = vdwg.mxu0
        %v555 = vadd.f32 %v449, %v550
        %556 = vst.msk [vmem:[#allocation2] sm:$0xff] %vm404, %v555
        // Predicated region
        $region53: #{tpu_custom_call.1} parent=47 // pred_check
          %p557 = pneg %p340
        $region54: #{tpu_custom_call.1} parent=47 // pred_check_branch
          %559 = sbr.rel (%p557) target = $region56
        $region55: #{tpu_custom_call.1} parent=47 // pred_region
          %v560 = vld [vmem:[#allocation2] sm:$0xff]
          %v561 = vld [vmem:[%s6] sm:$0x1]
          %v563 = vlaneseq
          %v564 = vshrl.u32 %v563, 7
          %v565 = vsub.s32 0, %v564
          %v566 = vrot.slane %v561, %v565
          %v568 = vadd.f32 %v560, %v566
          %569 = vst.msk [vmem:[%s321] sm:$0xff] %vm404, %v568
        $region56: #{tpu_custom_call.1} parent=47 // pred_fallthru
          _
        %s570 = sand.u32 %s208, 1
        %s571 = scalar_lea.sflag [#allocation5], %s570
        %s572 = sand.u32 %s208, 1
        %s573 = smul.addr %s572, 8
        %s574 = scalar_lea.vmem [#allocation4], %s573
        // Predicated region
        $region57: #{tpu_custom_call.1} parent=47 // pred_check
          %p575 = pneg %p218
        $region58: #{tpu_custom_call.1} parent=47 // pred_check_branch
          %577 = sbr.rel (%p575) target = $region60
        $region59: #{tpu_custom_call.1} parent=47 // pred_region
          %s579 = ssub.s32 128, 128
          %580 = vsyncadd %s571, %s579
          %s581 = smul.addr %s25, 128
          %s582 = scalar_lea.hbm %s7, %s581
          %s584 = sshll.u32 %s574, 4
          %s585 = int_to_ptr.vmem [resolvable:$true] %s584
          %587 = dma.vmem_to_hbm [thread:$0]  %s585, 128, %s582, %s571
        $region60: #{tpu_custom_call.1} parent=47 // pred_fallthru
          _
      $region48: #{tpu_custom_call.1} parent=5 // pred_fallthru
        _
      %p588 = scmp.le.s32.totalorder 2, %s16
      // Predicated region
      $region61: #{tpu_custom_call.1} parent=5 // pred_check
        %p589 = pneg %p588
      $region62: #{tpu_custom_call.1} parent=5 // pred_check_branch
        %591 = sbr.rel (%p589) target = $region64
      $region63: #{tpu_custom_call.1} parent=5 // pred_region
        %s592 = ssub.s32 %s16, 2
        // Predicated region
        $region65: #{tpu_custom_call.1} parent=63 // pred_check
          %p593 = pneg %p224
        $region66: #{tpu_custom_call.1} parent=63 // pred_check_branch
          %595 = sbr.rel (%p593) target = $region68
        $region67: #{tpu_custom_call.1} parent=63 // pred_region
          %s596 = sand.u32 %s209, 1
          %s597 = scalar_lea.sflag [#allocation5], %s596
          %s598 = sand.u32 %s209, 1
          %s599 = smul.addr %s598, 8
          %s600 = scalar_lea.vmem [#allocation4], %s599
          %601 = dma.done %s597, 128
        $region68: #{tpu_custom_call.1} parent=63 // pred_fallthru
          _
      $region64: #{tpu_custom_call.1} parent=5 // pred_fallthru
        _
    $region6: #{tpu_custom_call.1} parent=1 // loop_footer
      %s20 = sadd.s32 1, %s16
    $region7: #{tpu_custom_call.1} parent=1 // loop_footer_branch
      %15 = sbr.rel target = $region3
    $region8: #{tpu_custom_call.1} parent=1 // loop_exit
      _
    %602 = vsyncpa [#allocation5], 1
    %s603 = scalar_lea.sflag [#allocation5], 1
    %604 = vsyncpa %s603, 1

</llo_original>
